<compile_context>
chip_gen: v7x
topology: tpu7x:2x2x1
jax: 0.10.0
libtpu: 0.0.40
codegen_flags: <defaults>
</compile_context>

<pallas_src>
import numpy as np
import jax
import jax.numpy as jnp
from jax.experimental import pallas as pl
from jax.experimental.pallas import tpu as pltpu


# ----------------------------------------------------------------------------
# Gaussian kernel construction (host-side, compile-time constants)
# ----------------------------------------------------------------------------

def _kernel_size_from_sigma(sigma: float) -> int:
    unrounded = ((sigma - 0.8) / 0.3 + 1) * 2 + 1
    k = int(unrounded)
    if k < unrounded:
        k += 1
    if k % 2 == 0:
        k += 1
    return max(3, k)


def _gaussian_kernel1d(kernel_size: int, sigma: float) -> np.ndarray:
    half = (kernel_size - 1) * 0.5
    x = np.linspace(-half, half, kernel_size, dtype=np.float32)
    pdf = np.exp(-0.5 * (x / sigma) ** 2)
    return (pdf / pdf.sum()).astype(np.float32)


def _reflect_index(i: int, n: int) -> int:
    # Edge-excluding reflect ("reflect" mode) for i in [-(n-1), 2n-2].
    if i < 0:
        i = -i
    if i >= n:
        i = 2 * (n - 1) - i
    return i


def _reflect_toeplitz(n: int, k1d: np.ndarray) -> np.ndarray:
    """Banded Toeplitz matrix M (n, n) for RIGHT multiplication:
       out[..., o] = sum_s x[..., s] * M[s, o]
    with edge-excluding reflect padding folded into boundary columns."""
    K = k1d.shape[0]
    pad = K // 2
    m = np.zeros((n, n), np.float32)
    for o in range(n):
        for j in range(K):
            s = _reflect_index(o + j - pad, n)
            m[s, o] += float(k1d[j])
    return m


# ----------------------------------------------------------------------------
# Kernels
# ----------------------------------------------------------------------------

def _cast_out(v, dtype):
    """Round + clamp for integer image dtypes (torchvision behavior), plain cast otherwise."""
    if jnp.issubdtype(dtype, jnp.integer):
        info = jnp.iinfo(dtype)
        v = jnp.clip(jnp.round(v), info.min, info.max)
    return v.astype(dtype)


def _mxu_blur_kernel(x_ref, sw_ref, sh_ref, out_ref):
    # x_ref  : (TB, H, W)  input planes (storage dtype)
    # sw_ref : (W, W)      reflect-Toeplitz, right-multiply along W
    # sh_ref : (H, H)      reflect-Toeplitz, left-multiply along H
    # out_ref: (TB, H, W)
    TB, H, W = out_ref.shape
    x = x_ref[...].astype(jnp.float32)

    # Horizontal pass on the MXU: contract W with Sw -> (TB, H, W), natural order.
    tmp = jnp.einsum('bhw,wk->bhk', x, sw_ref[...],
                     preferred_element_type=jnp.float32)

    # Vertical pass: batched matmul with Sh broadcast over the plane batch so
    # dot_general emits output directly in (b, h, w) order (no XLU transpose).
    sh_b = jnp.broadcast_to(sh_ref[...], (TB, H, H))
    out = jnp.einsum('bhk,bkw->bhw', sh_b, tmp,
                     preferred_element_type=jnp.float32)

    out_ref[...] = _cast_out(out, out_ref.dtype)


def _make_vpu_kernel(k1d: np.ndarray, H: int, W: int):
    """Separable VPU fallback (very large planes): taps baked as constants,
    symmetric-tap pairing, fused reflect padding in VMEM scratch."""
    K = int(k1d.shape[0])
    pad = K // 2
    taps = [float(t) for t in k1d]

    def kernel(x_ref, out_ref, xw_ref, hb_ref):
        # x_ref  : (TB, H, W)        input planes
        # xw_ref : (TB, H, W + 2p)   f32 scratch, reflect-padded along W
        # hb_ref : (TB, H + 2p, W)   f32 scratch, h-pass result padded along H
        x = x_ref[...].astype(jnp.float32)

        # Reflect padding along W (edge-excluding).  The 2*pad single-column
        # writes are masked lane stores, acceptable on this fallback path only.
        xw_ref[:, :, pad:pad + W] = x
        for j in range(pad):
            xw_ref[:, :, j:j + 1] = x[:, :, pad - j:pad - j + 1]
            xw_ref[:, :, pad + W + j:pad + W + j + 1] = x[:, :, W - 2 - j:W - 1 - j]

        # Horizontal pass with symmetric-tap pairing: center + pad paired MACs.
        acc = taps[pad] * x
        for j in range(pad):
            acc = acc + taps[j] * (xw_ref[:, :, j:j + W]
                                   + xw_ref[:, :, K - 1 - j:K - 1 - j + W])

        # Reflect padding along H; h-pass result written straight into scratch.
        hb_ref[:, pad:pad + H, :] = acc
        for i in range(pad):
            hb_ref[:, i:i + 1, :] = acc[:, pad - i:pad - i + 1, :]
            hb_ref[:, pad + H + i:pad + H + i + 1, :] = acc[:, H - 2 - i:H - 1 - i, :]

        # Vertical pass with symmetric-tap pairing.
        accv = taps[pad] * acc
        for i in range(pad):
            accv = accv + taps[i] * (hb_ref[:, i:i + H, :]
                                     + hb_ref[:, K - 1 - i:K - 1 - i + H, :])

        out_ref[...] = _cast_out(accv, out_ref.dtype)

    return kernel


# ----------------------------------------------------------------------------
# Wrapper
# ----------------------------------------------------------------------------

def _pick_plane_batch(num_planes: int, per_plane_bytes: int,
                      budget_bytes: int = 16 << 20,
                      min_split_block_bytes: int = 2 << 20) -> int:
    """Largest divisor of num_planes whose per-step footprint stays under the
    budget.  Forces >=2 grid steps (so v7x's two TensorCores both get work)
    only when each half would still be a multi-MiB block; on single-TC
    v5e/v6e an extra grid step only costs ~0.35us so this is harmless."""
    cap = max(1, min(num_planes, budget_bytes // max(per_plane_bytes, 1)))
    half = num_planes // 2
    if half >= 1 and half * per_plane_bytes >= min_split_block_bytes:
        cap = min(cap, half)
    for tb in range(cap, 0, -1):
        if num_planes % tb == 0:
            return tb
    return 1


def gaussian_blur_pallas(x: jax.Array, sigma: float, force_path: str | None = None) -> jax.Array:
    """x: (N, C, H, W). Returns the blurred array, same shape/dtype."""
    if sigma <= 0.0:
        return x

    K = _kernel_size_from_sigma(sigma)
    pad = K // 2
    N, C, H, W = x.shape
    if pad >= H or pad >= W:
        raise ValueError(
            f"reflect padding requires pad < spatial dims; got pad={pad}, H={H}, W={W}")

    B = N * C
    x_flat = x.reshape(B, H, W)
    k1d = _gaussian_kernel1d(K, sigma)
    itm = x.dtype.itemsize
    vmem_limit = 48 * 1024 * 1024

    # Per-plane per-grid-step footprint estimates (double-buffered I/O blocks
    # + in-kernel f32 temporaries [+ broadcast Sh for the MXU path]).
    per_plane_mxu = H * W * (4 * itm + 12) + H * H * 4
    per_plane_vpu = (H * W * (4 * itm + 12)
                     + 4 * (H * (W + 2 * pad) + (H + 2 * pad) * W))
    matrices_bytes = 2 * 4 * (H * H + W * W)   # double-buffered f32 Toeplitz pair

    if force_path is None:
        # MXU/Toeplitz path unless planes are huge (matmul does W / H MACs per
        # pixel vs 2K for the VPU path, and the matrices stop fitting nicely).
        use_mxu = (max(H, W) <= 1024
                   and matrices_bytes + per_plane_mxu <= (40 << 20))
    else:
        use_mxu = (force_path == "mxu")

    if use_mxu:
        sw = jnp.asarray(_reflect_toeplitz(W, k1d))        # (W, W), right-multiply
        sh = jnp.asarray(_reflect_toeplitz(H, k1d).T)      # (H, H), left-multiply

        TB = _pick_plane_batch(B, per_plane_mxu)
        out = pl.pallas_call(
            _mxu_blur_kernel,
            out_shape=jax.ShapeDtypeStruct((B, H, W), x.dtype),
            grid_spec=pltpu.PrefetchScalarGridSpec(
                num_scalar_prefetch=0,
                grid=(B // TB,),
                in_specs=[
                    pl.BlockSpec((TB, H, W), lambda b: (b, 0, 0)),
                    # Constant index maps: matrices are DMA'd once and stay resident.
                    pl.BlockSpec((W, W), lambda b: (0, 0)),
                    pl.BlockSpec((H, H), lambda b: (0, 0)),
                ],
                out_specs=pl.BlockSpec((TB, H, W), lambda b: (b, 0, 0)),
            ),
            compiler_params=pltpu.CompilerParams(
                dimension_semantics=("parallel",),
                vmem_limit_bytes=vmem_limit,
            ),
        )(x_flat, sw, sh)
    else:
        kernel = _make_vpu_kernel(k1d, H, W)
        TB = _pick_plane_batch(B, per_plane_vpu)
        out = pl.pallas_call(
            kernel,
            out_shape=jax.ShapeDtypeStruct((B, H, W), x.dtype),
            grid_spec=pltpu.PrefetchScalarGridSpec(
                num_scalar_prefetch=0,
                grid=(B // TB,),
                in_specs=[pl.BlockSpec((TB, H, W), lambda b: (b, 0, 0))],
                out_specs=pl.BlockSpec((TB, H, W), lambda b: (b, 0, 0)),
                scratch_shapes=[
                    pltpu.VMEM((TB, H, W + 2 * pad), jnp.float32),  # W-padded input
                    pltpu.VMEM((TB, H + 2 * pad, W), jnp.float32),  # H-padded h-pass
                ],
            ),
            compiler_params=pltpu.CompilerParams(
                dimension_semantics=("parallel",),
                vmem_limit_bytes=vmem_limit,
            ),
        )(x_flat)

    return out.reshape(N, C, H, W)


# ----------------------------------------------------------------------------
# Pure-JAX reference (dense K x K convolution with the outer-product kernel)
# ----------------------------------------------------------------------------

def gaussian_blur_ref(x: jax.Array, sigma: float) -> jax.Array:
    if sigma <= 0.0:
        return x
    K = _kernel_size_from_sigma(sigma)
    pad = K // 2
    N, C, H, W = x.shape
    k1d = _gaussian_kernel1d(K, sigma)
    w2d = jnp.asarray(np.outer(k1d, k1d).astype(np.float32))
    xp = jnp.pad(x, ((0, 0), (0, 0), (pad, pad), (pad, pad)), mode="reflect")
    acc = jnp.zeros((N, C, H, W), jnp.float32)
    for i in range(K):
        for j in range(K):
            acc = acc + w2d[i, j] * xp[:, :, i:i + H, j:j + W].astype(jnp.float32)
    return acc.astype(x.dtype)


if __name__ == "__main__":
    key = jax.random.PRNGKey(0)
    N, C, H, W = 2, 4, 16, 16
    x = jax.random.normal(key, (N, C, H, W), dtype=jnp.float32)

    ok = True
    for sigma in (1.0, 2.0):   # kernel_size = 5 and 11 per the module's formula
        y_ref = gaussian_blur_ref(x, sigma)

        # MXU / Toeplitz path (default).  Looser tolerance: the MXU's default
        # f32 matmul precision on TPU may truncate operands toward bf16.
        y_mxu = jax.block_until_ready(gaussian_blur_pallas(x, sigma, force_path="mxu"))
        ok = ok and (y_mxu.shape == x.shape) and (y_mxu.dtype == x.dtype)
        ok = ok and bool(jnp.allclose(y_mxu, y_ref, atol=2e-2, rtol=2e-2))

        # VPU fallback path (exercised here at small shapes for correctness).
        y_vpu = jax.block_until_ready(gaussian_blur_pallas(x, sigma, force_path="vpu"))
        ok = ok and (y_vpu.shape == x.shape) and (y_vpu.dtype == x.dtype)
        ok = ok and bool(jnp.allclose(y_vpu, y_ref, atol=1e-5, rtol=1e-5))

    assert ok
    print("KERNEL_OK")
</pallas_src>

<mosaic_0001>
module attributes {stable_mosaic.version = 11 : i64} {
  func.func @_mxu_blur_kernel(%arg0: i32, %arg1: memref<8x16x16xf32, #tpu.memory_space<vmem>>, %arg2: memref<16x16xf32, #tpu.memory_space<vmem>>, %arg3: memref<16x16xf32, #tpu.memory_space<vmem>>, %arg4: memref<8x16x16xf32, #tpu.memory_space<vmem>>) attributes {dimension_semantics = [#tpu.dimension_semantics<parallel>], iteration_bounds = array<i64: 1>, scalar_prefetch = 0 : i64, scratch_operands = 0 : i64, tpu.core_type = #tpu.core_type<tc>, window_params = [{transform_indices = @transform_0, window_bounds = array<i64: 8, 16, 16>}, {pipeline_mode = #tpu.pipeline_mode<synchronous>, transform_indices = @transform_1, window_bounds = array<i64: 16, 16>}, {pipeline_mode = #tpu.pipeline_mode<synchronous>, transform_indices = @transform_2, window_bounds = array<i64: 16, 16>}, {transform_indices = @transform_3, window_bounds = array<i64: 8, 16, 16>}]} {
    %c0 = arith.constant 0 : index
    %c0_0 = arith.constant 0 : index
    %c0_1 = arith.constant 0 : index
    %0 = vector.load %arg1[%c0, %c0_0, %c0_1] : memref<8x16x16xf32, #tpu.memory_space<vmem>>, vector<8x16x16xf32>
    %c0_2 = arith.constant 0 : index
    %c0_3 = arith.constant 0 : index
    %1 = vector.load %arg2[%c0_2, %c0_3] : memref<16x16xf32, #tpu.memory_space<vmem>>, vector<16x16xf32>
    "tpu.trace_start"() <{level = 10 : i32, message = "bhw,wk->bhk"}> : () -> ()
    %cst = arith.constant dense<0.000000e+00> : vector<8x16x16xf32>
    %2 = tpu.matmul %0, %1, %cst {dimension_numbers = #tpu.dot_dimension_numbers<[2], [0], [0, 1], [1], [0, 0, 0, 1, 1, 1], [], []>} : vector<8x16x16xf32>, vector<16x16xf32>, vector<8x16x16xf32> -> vector<8x16x16xf32>
    "tpu.trace_stop"() : () -> ()
    %c0_4 = arith.constant 0 : index
    %c0_5 = arith.constant 0 : index
    %3 = vector.load %arg3[%c0_4, %c0_5] : memref<16x16xf32, #tpu.memory_space<vmem>>, vector<16x16xf32>
    %4 = vector.shape_cast %3 : vector<16x16xf32> to vector<1x16x16xf32>
    %5 = vector.broadcast %4 : vector<1x16x16xf32> to vector<8x16x16xf32>
    "tpu.trace_start"() <{level = 10 : i32, message = "bhk,bkw->bhw"}> : () -> ()
    %cst_6 = arith.constant dense<0.000000e+00> : vector<8x16x16xf32>
    %6 = tpu.matmul %5, %2, %cst_6 {dimension_numbers = #tpu.dot_dimension_numbers<[2], [1], [1], [2], [0, 0, 0, 1, 1, 2], [0], [0]>} : vector<8x16x16xf32>, vector<8x16x16xf32>, vector<8x16x16xf32> -> vector<8x16x16xf32>
    "tpu.trace_stop"() : () -> ()
    %c0_7 = arith.constant 0 : index
    %c0_8 = arith.constant 0 : index
    %c0_9 = arith.constant 0 : index
    %7 = vector.load %arg4[%c0_7, %c0_8, %c0_9] : memref<8x16x16xf32, #tpu.memory_space<vmem>>, vector<8x16x16xf32>
    tpu.vector_store %arg4[%c0_7, %c0_8, %c0_9], %6 {strides = array<i32>} : memref<8x16x16xf32, #tpu.memory_space<vmem>>, vector<8x16x16xf32>,
    return
  }
  func.func @transform_0(%arg0: i32) -> (i32, i32, i32) {
    %c0_i32 = arith.constant 0 : i32
    %c0_i32_0 = arith.constant 0 : i32
    %c0_i32_1 = arith.constant 0 : i32
    return %arg0, %c0_i32, %c0_i32_0 : i32, i32, i32
  }
  func.func @transform_1(%arg0: i32) -> (i32, i32) {
    %c0_i32 = arith.constant 0 : i32
    %c0_i32_0 = arith.constant 0 : i32
    %c0_i32_1 = arith.constant 0 : i32
    return %c0_i32, %c0_i32_0 : i32, i32
  }
  func.func @transform_2(%arg0: i32) -> (i32, i32) {
    %c0_i32 = arith.constant 0 : i32
    %c0_i32_0 = arith.constant 0 : i32
    %c0_i32_1 = arith.constant 0 : i32
    return %c0_i32, %c0_i32_0 : i32, i32
  }
  func.func @transform_3(%arg0: i32) -> (i32, i32, i32) {
    %c0_i32 = arith.constant 0 : i32
    %c0_i32_0 = arith.constant 0 : i32
    %c0_i32_1 = arith.constant 0 : i32
    return %arg0, %c0_i32, %c0_i32_0 : i32, i32, i32
  }
}

</mosaic_0001>

<llo_original>
// kernel: tpu_custom_call.1
$region0: #{tpu_custom_call.1}
  #allocation0 [shape = 'u32[]', space=smem, size = 0x4, offset = 0x4, fixed_abs, tag = 'smem constant byte address 0x4 - core index']
  #allocation1 [shape = 'u32[144,128]{1,0:T(1,128)}', space=vmem, size = 0x12000, scoped, tag = 'internal scratch']
  %s0 = inlined_call_operand.hbm [shape: f32[8,16,16], index: 0, kind: input, shape index: {}]
  %s1 = inlined_call_operand.hbm [shape: f32[16,16], index: 1, kind: input, shape index: {}]
  %s2 = inlined_call_operand.hbm [shape: f32[16,16], index: 2, kind: input, shape index: {}]
  %s3 = inlined_call_operand.hbm [shape: f32[8,16,16], index: 3, kind: output, shape index: {}]
  %s4 = sld [smem:[#allocation0]]
  $region34: #{tpu_custom_call.1} parent=0
    _
  %s6 = ssub.s32 1, %s4
  %s7 = scalar_select 0, %s6, %s4
  $region1: #{tpu_custom_call.1} parent=0
    #allocation2 [shape = 'u8[65536]{0}', space=vmem, size = 0x10000, scoped, tag = 'input window, operand 0, single buffered']
    #allocation3 [shape = 's32[1]{0}', space=sflag, size = 0x4, scoped, tag = 'scoped memory for tpu_custom_call.1']
    #allocation4 [shape = 's32[1]{0}', space=sflag, size = 0x4, scoped, tag = 'scoped memory for tpu_custom_call.1']
    #allocation5 [shape = 'u8[8192]{0}', space=vmem, size = 0x2000, scoped, tag = 'input window, operand 1, single buffered']
    #allocation6 [shape = 's32[1]{0}', space=sflag, size = 0x4, scoped, tag = 'scoped memory for tpu_custom_call.1']
    #allocation7 [shape = 'u8[8192]{0}', space=vmem, size = 0x2000, scoped, tag = 'input window, operand 2, single buffered']
    #allocation8 [shape = 'u8[65536]{0}', space=vmem, size = 0x10000, scoped, tag = 'output window, operand 0, single buffered']
    %8 = vsyncpa [#allocation3], 0
    %9 = vsyncpa [#allocation6], 0
    %10 = vsyncpa [#allocation4], 0
    // Predicated region
    $region2: #{tpu_custom_call.1} parent=1 // pred_check
      _
    $region3: #{tpu_custom_call.1} parent=1 // pred_check_branch
      %12 = sbr.rel (0) target = $region5
    $region4: #{tpu_custom_call.1} parent=1 // pred_region
      %s14 = ssub.s32 2048, 2048
      %15 = vsyncadd [#allocation3], %s14
      %s16 = sshll.u32 [#allocation2], 4
      %s17 = int_to_ptr.vmem [resolvable:$true] %s16
      %22 = dma.hbm_to_vmem [thread:$0]  %s0, 2048, %s17, [#allocation3], 128, 128, 8
    $region5: #{tpu_custom_call.1} parent=1 // pred_fallthru
      _
    // Predicated region
    $region6: #{tpu_custom_call.1} parent=1 // pred_check
      _
    $region7: #{tpu_custom_call.1} parent=1 // pred_check_branch
      %24 = sbr.rel (0) target = $region9
    $region8: #{tpu_custom_call.1} parent=1 // pred_region
      %s26 = ssub.s32 256, 256
      %27 = vsyncadd [#allocation6], %s26
      %s28 = sshll.u32 [#allocation5], 4
      %s29 = int_to_ptr.vmem [resolvable:$true] %s28
      %34 = dma.hbm_to_vmem [thread:$0]  %s1, 256, %s29, [#allocation6], 128, 128, 8
    $region9: #{tpu_custom_call.1} parent=1 // pred_fallthru
      _
    // Predicated region
    $region10: #{tpu_custom_call.1} parent=1 // pred_check
      _
    $region11: #{tpu_custom_call.1} parent=1 // pred_check_branch
      %36 = sbr.rel (0) target = $region13
    $region12: #{tpu_custom_call.1} parent=1 // pred_region
      %s38 = ssub.s32 256, 256
      %39 = vsyncadd [#allocation6], %s38
      %s40 = sshll.u32 [#allocation7], 4
      %s41 = int_to_ptr.vmem [resolvable:$true] %s40
      %46 = dma.hbm_to_vmem [thread:$0]  %s2, 256, %s41, [#allocation6], 128, 128, 8
    $region13: #{tpu_custom_call.1} parent=1 // pred_fallthru
      _
    // Predicated region
    $region14: #{tpu_custom_call.1} parent=1 // pred_check
      _
    $region15: #{tpu_custom_call.1} parent=1 // pred_check_branch
      %48 = sbr.rel (0) target = $region17
    $region16: #{tpu_custom_call.1} parent=1 // pred_region
      %49 = dma.done [#allocation3], 2048
    $region17: #{tpu_custom_call.1} parent=1 // pred_fallthru
      _
    // Predicated region
    $region18: #{tpu_custom_call.1} parent=1 // pred_check
      _
    $region19: #{tpu_custom_call.1} parent=1 // pred_check_branch
      %51 = sbr.rel (0) target = $region21
    $region20: #{tpu_custom_call.1} parent=1 // pred_region
      %52 = dma.done [#allocation6], 256
    $region21: #{tpu_custom_call.1} parent=1 // pred_fallthru
      _
    // Predicated region
    $region22: #{tpu_custom_call.1} parent=1 // pred_check
      _
    $region23: #{tpu_custom_call.1} parent=1 // pred_check_branch
      %54 = sbr.rel (0) target = $region25
    $region24: #{tpu_custom_call.1} parent=1 // pred_region
      %55 = dma.done [#allocation6], 256
    $region25: #{tpu_custom_call.1} parent=1 // pred_fallthru
      _
    %v56 = vld [vmem:[#allocation2] sm:$0xff]
    %v57 = vld [vmem:[#allocation2 + $0x8] sm:$0xff]
    %v58 = vld [vmem:[#allocation2 + $0x10] sm:$0xff]
    %v59 = vld [vmem:[#allocation2 + $0x18] sm:$0xff]
    %v60 = vld [vmem:[#allocation2 + $0x20] sm:$0xff]
    %v61 = vld [vmem:[#allocation2 + $0x28] sm:$0xff]
    %v62 = vld [vmem:[#allocation2 + $0x30] sm:$0xff]
    %v63 = vld [vmem:[#allocation2 + $0x38] sm:$0xff]
    %v64 = vld [vmem:[#allocation2 + $0x40] sm:$0xff]
    %v65 = vld [vmem:[#allocation2 + $0x48] sm:$0xff]
    %v66 = vld [vmem:[#allocation2 + $0x50] sm:$0xff]
    %v67 = vld [vmem:[#allocation2 + $0x58] sm:$0xff]
    %v68 = vld [vmem:[#allocation2 + $0x60] sm:$0xff]
    %v69 = vld [vmem:[#allocation2 + $0x68] sm:$0xff]
    %v70 = vld [vmem:[#allocation2 + $0x70] sm:$0xff]
    %v71 = vld [vmem:[#allocation2 + $0x78] sm:$0xff]
    %v72 = vld [vmem:[#allocation5] sm:$0xff]
    %v73 = vld [vmem:[#allocation5 + $0x8] sm:$0xff]
    %vm74 = vcmask 130048
    %v76 = vsel %vm74, %v56, 0
    %v79 = vsel %vm74, %v57, 0
    %v82 = vsel %vm74, %v58, 0
    %v85 = vsel %vm74, %v59, 0
    %v88 = vsel %vm74, %v60, 0
    %v91 = vsel %vm74, %v61, 0
    %v94 = vsel %vm74, %v62, 0
    %v97 = vsel %vm74, %v63, 0
    %v100 = vsel %vm74, %v64, 0
    %v103 = vsel %vm74, %v65, 0
    %v106 = vsel %vm74, %v66, 0
    %v109 = vsel %vm74, %v67, 0
    %v112 = vsel %vm74, %v68, 0
    %v115 = vsel %vm74, %v69, 0
    %v118 = vsel %vm74, %v70, 0
    %v121 = vsel %vm74, %v71, 0
    %123 = vmatprep.subr.mxu0 0.0
    %124 = vmatpush1.msra.mxu0 %v72
    %125 = vmatprep.subr.mxu0 0.0
    %126 = vmatpush1.msra.mxu0 %v73
    %127 = vmatprep.subr.mxu0 0.0
    %128 = vmatpush1.msra.mxu0 0.0
    %129 = vmatprep.subr.mxu0 0.0
    %130 = vmatpush1.msra.mxu0 0.0
    %131 = vmatprep.subr.mxu0 0.0
    %132 = vmatpush1.msra.mxu0 0.0
    %133 = vmatprep.subr.mxu0 0.0
    %134 = vmatpush1.msra.mxu0 0.0
    %135 = vmatprep.subr.mxu0 0.0
    %136 = vmatpush1.msra.mxu0 0.0
    %137 = vmatprep.subr.mxu0 0.0
    %138 = vmatpush1.msra.mxu0 0.0
    %139 = vmatprep.subr.mxu0 0.0
    %140 = vmatpush1.msra.mxu0 0.0
    %141 = vmatprep.subr.mxu0 0.0
    %142 = vmatpush1.msra.mxu0 0.0
    %143 = vmatprep.subr.mxu0 0.0
    %144 = vmatpush1.msra.mxu0 0.0
    %145 = vmatprep.subr.mxu0 0.0
    %146 = vmatpush1.msra.mxu0 0.0
    %147 = vmatprep.subr.mxu0 0.0
    %148 = vmatpush1.msra.mxu0 0.0
    %149 = vmatprep.subr.mxu0 0.0
    %150 = vmatpush1.msra.mxu0 0.0
    %151 = vmatprep.subr.mxu0 0.0
    %152 = vmatpush1.msra.mxu0 0.0
    %153 = vmatprep.subr.mxu0 0.0
    %154 = vmatpush1.msra.mxu0 0.0
    %155 = vmatprep.subr.mxu0 0.0
    %156 = vmatpush1.msra.mxu0 0.0
    %157 = vmatprep.subr.mxu0 0.0
    %158 = vmatpush1.msra.mxu0 0.0
    %159 = vmatprep.subr.mxu0 0.0
    %160 = vmatpush1.msra.mxu0 0.0
    %161 = vmatprep.subr.mxu0 0.0
    %162 = vmatpush1.msra.mxu0 0.0
    %163 = vmatprep.subr.mxu0 0.0
    %164 = vmatpush1.msra.mxu0 0.0
    %165 = vmatprep.subr.mxu0 0.0
    %166 = vmatpush1.msra.mxu0 0.0
    %167 = vmatprep.subr.mxu0 0.0
    %168 = vmatpush1.msra.mxu0 0.0
    %169 = vmatprep.subr.mxu0 0.0
    %170 = vmatpush1.msra.mxu0 0.0
    %171 = vmatprep.subr.mxu0 0.0
    %172 = vmatpush1.msra.mxu0 0.0
    %173 = vmatprep.subr.mxu0 0.0
    %174 = vmatpush1.msra.mxu0 0.0
    %175 = vmatprep.subr.mxu0 0.0
    %176 = vmatpush1.msra.mxu0 0.0
    %177 = vmatprep.subr.mxu0 0.0
    %178 = vmatpush1.msra.mxu0 0.0
    %179 = vmatprep.subr.mxu0 0.0
    %180 = vmatpush1.msra.mxu0 0.0
    %181 = vmatprep.subr.mxu0 0.0
    %182 = vmatpush1.msra.mxu0 0.0
    %183 = vmatprep.subr.mxu0 0.0
    %184 = vmatpush1.msra.mxu0 0.0
    %185 = vmatprep.subr.mxu0 0.0
    %186 = vmatpush1.msra.mxu0 0.0
    %187 = vmatprep.mubr.f32.mxu0 0.0
    %188 = vmatmul.mubr.f32.gmra.mrb[0].mxu0 %v76
    %v189 = vpop.f32.mrb[0].mxu0
    %v190 = vadd.f32 0.0, %v189
    %v191 = vpop.f32.mrb[0].mxu0
    %192 = vmatprep.mubr.f32.mxu0 0.0
    %193 = vmatmul.mubr.f32.gmra.mrb[0].mxu0 %v79
    %v194 = vpop.f32.mrb[0].mxu0
    %v195 = vadd.f32 0.0, %v194
    %v196 = vpop.f32.mrb[0].mxu0
    %197 = vmatprep.mubr.f32.mxu0 0.0
    %198 = vmatmul.mubr.f32.gmra.mrb[0].mxu0 %v82
    %v199 = vpop.f32.mrb[0].mxu0
    %v200 = vadd.f32 0.0, %v199
    %v201 = vpop.f32.mrb[0].mxu0
    %202 = vmatprep.mubr.f32.mxu0 0.0
    %203 = vmatmul.mubr.f32.gmra.mrb[0].mxu0 %v85
    %v204 = vpop.f32.mrb[0].mxu0
    %v205 = vadd.f32 0.0, %v204
    %v206 = vpop.f32.mrb[0].mxu0
    %207 = vmatprep.mubr.f32.mxu0 0.0
    %208 = vmatmul.mubr.f32.gmra.mrb[0].mxu0 %v88
    %v209 = vpop.f32.mrb[0].mxu0
    %v210 = vadd.f32 0.0, %v209
    %v211 = vpop.f32.mrb[0].mxu0
    %212 = vmatprep.mubr.f32.mxu0 0.0
    %213 = vmatmul.mubr.f32.gmra.mrb[0].mxu0 %v91
    %v214 = vpop.f32.mrb[0].mxu0
    %v215 = vadd.f32 0.0, %v214
    %v216 = vpop.f32.mrb[0].mxu0
    %217 = vmatprep.mubr.f32.mxu0 0.0
    %218 = vmatmul.mubr.f32.gmra.mrb[0].mxu0 %v94
    %v219 = vpop.f32.mrb[0].mxu0
    %v220 = vadd.f32 0.0, %v219
    %v221 = vpop.f32.mrb[0].mxu0
    %222 = vmatprep.mubr.f32.mxu0 0.0
    %223 = vmatmul.mubr.f32.gmra.mrb[0].mxu0 %v97
    %v224 = vpop.f32.mrb[0].mxu0
    %v225 = vadd.f32 0.0, %v224
    %v226 = vpop.f32.mrb[0].mxu0
    %227 = vmatprep.mubr.f32.mxu0 0.0
    %228 = vmatmul.mubr.f32.gmra.mrb[0].mxu0 %v100
    %v229 = vpop.f32.mrb[0].mxu0
    %v230 = vadd.f32 0.0, %v229
    %v231 = vpop.f32.mrb[0].mxu0
    %232 = vmatprep.mubr.f32.mxu0 0.0
    %233 = vmatmul.mubr.f32.gmra.mrb[0].mxu0 %v103
    %v234 = vpop.f32.mrb[0].mxu0
    %v235 = vadd.f32 0.0, %v234
    %v236 = vpop.f32.mrb[0].mxu0
    %237 = vmatprep.mubr.f32.mxu0 0.0
    %238 = vmatmul.mubr.f32.gmra.mrb[0].mxu0 %v106
    %v239 = vpop.f32.mrb[0].mxu0
    %v240 = vadd.f32 0.0, %v239
    %v241 = vpop.f32.mrb[0].mxu0
    %242 = vmatprep.mubr.f32.mxu0 0.0
    %243 = vmatmul.mubr.f32.gmra.mrb[0].mxu0 %v109
    %v244 = vpop.f32.mrb[0].mxu0
    %v245 = vadd.f32 0.0, %v244
    %v246 = vpop.f32.mrb[0].mxu0
    %247 = vmatprep.mubr.f32.mxu0 0.0
    %248 = vmatmul.mubr.f32.gmra.mrb[0].mxu0 %v112
    %v249 = vpop.f32.mrb[0].mxu0
    %v250 = vadd.f32 0.0, %v249
    %v251 = vpop.f32.mrb[0].mxu0
    %252 = vmatprep.mubr.f32.mxu0 0.0
    %253 = vmatmul.mubr.f32.gmra.mrb[0].mxu0 %v115
    %v254 = vpop.f32.mrb[0].mxu0
    %v255 = vadd.f32 0.0, %v254
    %v256 = vpop.f32.mrb[0].mxu0
    %257 = vmatprep.mubr.f32.mxu0 0.0
    %258 = vmatmul.mubr.f32.gmra.mrb[0].mxu0 %v118
    %v259 = vpop.f32.mrb[0].mxu0
    %v260 = vadd.f32 0.0, %v259
    %v261 = vpop.f32.mrb[0].mxu0
    %262 = vmatprep.mubr.f32.mxu0 0.0
    %263 = vmatmul.mubr.f32.gmra.mrb[0].mxu0 %v121
    %v264 = vpop.f32.mrb[0].mxu0
    %v265 = vadd.f32 0.0, %v264
    %v266 = vpop.f32.mrb[0].mxu0
    %267 = vdwg.mxu0
    %v268 = vld [vmem:[#allocation7] sm:$0xff]
    %v269 = vld [vmem:[#allocation7 + $0x8] sm:$0xff]
    %v271 = vsel %vm74, %v268, 0
    %v274 = vsel %vm74, %v269, 0
    %276 = vmatprep.subr.mxu0 0.0
    %277 = vmatpush1.msra.mxu0 %v190
    %278 = vmatprep.subr.mxu0 0.0
    %279 = vmatpush1.msra.mxu0 %v195
    %280 = vmatprep.subr.mxu0 0.0
    %281 = vmatpush1.msra.mxu0 0.0
    %282 = vmatprep.subr.mxu0 0.0
    %283 = vmatpush1.msra.mxu0 0.0
    %284 = vmatprep.subr.mxu0 0.0
    %285 = vmatpush1.msra.mxu0 0.0
    %286 = vmatprep.subr.mxu0 0.0
    %287 = vmatpush1.msra.mxu0 0.0
    %288 = vmatprep.subr.mxu0 0.0
    %289 = vmatpush1.msra.mxu0 0.0
    %290 = vmatprep.subr.mxu0 0.0
    %291 = vmatpush1.msra.mxu0 0.0
    %292 = vmatprep.subr.mxu0 0.0
    %293 = vmatpush1.msra.mxu0 0.0
    %294 = vmatprep.subr.mxu0 0.0
    %295 = vmatpush1.msra.mxu0 0.0
    %296 = vmatprep.subr.mxu0 0.0
    %297 = vmatpush1.msra.mxu0 0.0
    %298 = vmatprep.subr.mxu0 0.0
    %299 = vmatpush1.msra.mxu0 0.0
    %300 = vmatprep.subr.mxu0 0.0
    %301 = vmatpush1.msra.mxu0 0.0
    %302 = vmatprep.subr.mxu0 0.0
    %303 = vmatpush1.msra.mxu0 0.0
    %304 = vmatprep.subr.mxu0 0.0
    %305 = vmatpush1.msra.mxu0 0.0
    %306 = vmatprep.subr.mxu0 0.0
    %307 = vmatpush1.msra.mxu0 0.0
    %308 = vmatprep.subr.mxu0 0.0
    %309 = vmatpush1.msra.mxu0 0.0
    %310 = vmatprep.subr.mxu0 0.0
    %311 = vmatpush1.msra.mxu0 0.0
    %312 = vmatprep.subr.mxu0 0.0
    %313 = vmatpush1.msra.mxu0 0.0
    %314 = vmatprep.subr.mxu0 0.0
    %315 = vmatpush1.msra.mxu0 0.0
    %316 = vmatprep.subr.mxu0 0.0
    %317 = vmatpush1.msra.mxu0 0.0
    %318 = vmatprep.subr.mxu0 0.0
    %319 = vmatpush1.msra.mxu0 0.0
    %320 = vmatprep.subr.mxu0 0.0
    %321 = vmatpush1.msra.mxu0 0.0
    %322 = vmatprep.subr.mxu0 0.0
    %323 = vmatpush1.msra.mxu0 0.0
    %324 = vmatprep.subr.mxu0 0.0
    %325 = vmatpush1.msra.mxu0 0.0
    %326 = vmatprep.subr.mxu0 0.0
    %327 = vmatpush1.msra.mxu0 0.0
    %328 = vmatprep.subr.mxu0 0.0
    %329 = vmatpush1.msra.mxu0 0.0
    %330 = vmatprep.subr.mxu0 0.0
    %331 = vmatpush1.msra.mxu0 0.0
    %332 = vmatprep.subr.mxu0 0.0
    %333 = vmatpush1.msra.mxu0 0.0
    %334 = vmatprep.subr.mxu0 0.0
    %335 = vmatpush1.msra.mxu0 0.0
    %336 = vmatprep.subr.mxu0 0.0
    %337 = vmatpush1.msra.mxu0 0.0
    %338 = vmatprep.subr.mxu0 0.0
    %339 = vmatpush1.msra.mxu0 0.0
    %340 = vmatprep.mubr.f32.mxu0 0.0
    %341 = vmatmul.mubr.f32.gmra.mrb[0].mxu0 %v271
    %v342 = vpop.f32.mrb[0].mxu0
    %v343 = vadd.f32 0.0, %v342
    %v344 = vpop.f32.mrb[0].mxu0
    %345 = vmatprep.mubr.f32.mxu0 0.0
    %346 = vmatmul.mubr.f32.gmra.mrb[0].mxu0 %v274
    %v347 = vpop.f32.mrb[0].mxu0
    %v348 = vadd.f32 0.0, %v347
    %v349 = vpop.f32.mrb[0].mxu0
    %350 = vdwg.mxu0
    %351 = vmatprep.subr.mxu0 0.0
    %352 = vmatpush1.msra.mxu0 %v200
    %353 = vmatprep.subr.mxu0 0.0
    %354 = vmatpush1.msra.mxu0 %v205
    %355 = vmatprep.subr.mxu0 0.0
    %356 = vmatpush1.msra.mxu0 0.0
    %357 = vmatprep.subr.mxu0 0.0
    %358 = vmatpush1.msra.mxu0 0.0
    %359 = vmatprep.subr.mxu0 0.0
    %360 = vmatpush1.msra.mxu0 0.0
    %361 = vmatprep.subr.mxu0 0.0
    %362 = vmatpush1.msra.mxu0 0.0
    %363 = vmatprep.subr.mxu0 0.0
    %364 = vmatpush1.msra.mxu0 0.0
    %365 = vmatprep.subr.mxu0 0.0
    %366 = vmatpush1.msra.mxu0 0.0
    %367 = vmatprep.subr.mxu0 0.0
    %368 = vmatpush1.msra.mxu0 0.0
    %369 = vmatprep.subr.mxu0 0.0
    %370 = vmatpush1.msra.mxu0 0.0
    %371 = vmatprep.subr.mxu0 0.0
    %372 = vmatpush1.msra.mxu0 0.0
    %373 = vmatprep.subr.mxu0 0.0
    %374 = vmatpush1.msra.mxu0 0.0
    %375 = vmatprep.subr.mxu0 0.0
    %376 = vmatpush1.msra.mxu0 0.0
    %377 = vmatprep.subr.mxu0 0.0
    %378 = vmatpush1.msra.mxu0 0.0
    %379 = vmatprep.subr.mxu0 0.0
    %380 = vmatpush1.msra.mxu0 0.0
    %381 = vmatprep.subr.mxu0 0.0
    %382 = vmatpush1.msra.mxu0 0.0
    %383 = vmatprep.subr.mxu0 0.0
    %384 = vmatpush1.msra.mxu0 0.0
    %385 = vmatprep.subr.mxu0 0.0
    %386 = vmatpush1.msra.mxu0 0.0
    %387 = vmatprep.subr.mxu0 0.0
    %388 = vmatpush1.msra.mxu0 0.0
    %389 = vmatprep.subr.mxu0 0.0
    %390 = vmatpush1.msra.mxu0 0.0
    %391 = vmatprep.subr.mxu0 0.0
    %392 = vmatpush1.msra.mxu0 0.0
    %393 = vmatprep.subr.mxu0 0.0
    %394 = vmatpush1.msra.mxu0 0.0
    %395 = vmatprep.subr.mxu0 0.0
    %396 = vmatpush1.msra.mxu0 0.0
    %397 = vmatprep.subr.mxu0 0.0
    %398 = vmatpush1.msra.mxu0 0.0
    %399 = vmatprep.subr.mxu0 0.0
    %400 = vmatpush1.msra.mxu0 0.0
    %401 = vmatprep.subr.mxu0 0.0
    %402 = vmatpush1.msra.mxu0 0.0
    %403 = vmatprep.subr.mxu0 0.0
    %404 = vmatpush1.msra.mxu0 0.0
    %405 = vmatprep.subr.mxu0 0.0
    %406 = vmatpush1.msra.mxu0 0.0
    %407 = vmatprep.subr.mxu0 0.0
    %408 = vmatpush1.msra.mxu0 0.0
    %409 = vmatprep.subr.mxu0 0.0
    %410 = vmatpush1.msra.mxu0 0.0
    %411 = vmatprep.subr.mxu0 0.0
    %412 = vmatpush1.msra.mxu0 0.0
    %413 = vmatprep.subr.mxu0 0.0
    %414 = vmatpush1.msra.mxu0 0.0
    %415 = vmatprep.mubr.f32.mxu0 0.0
    %416 = vmatmul.mubr.f32.gmra.mrb[0].mxu0 %v271
    %v417 = vpop.f32.mrb[0].mxu0
    %v418 = vadd.f32 0.0, %v417
    %v419 = vpop.f32.mrb[0].mxu0
    %420 = vmatprep.mubr.f32.mxu0 0.0
    %421 = vmatmul.mubr.f32.gmra.mrb[0].mxu0 %v274
    %v422 = vpop.f32.mrb[0].mxu0
    %v423 = vadd.f32 0.0, %v422
    %v424 = vpop.f32.mrb[0].mxu0
    %425 = vdwg.mxu0
    %426 = vmatprep.subr.mxu0 0.0
    %427 = vmatpush1.msra.mxu0 %v210
    %428 = vmatprep.subr.mxu0 0.0
    %429 = vmatpush1.msra.mxu0 %v215
    %430 = vmatprep.subr.mxu0 0.0
    %431 = vmatpush1.msra.mxu0 0.0
    %432 = vmatprep.subr.mxu0 0.0
    %433 = vmatpush1.msra.mxu0 0.0
    %434 = vmatprep.subr.mxu0 0.0
    %435 = vmatpush1.msra.mxu0 0.0
    %436 = vmatprep.subr.mxu0 0.0
    %437 = vmatpush1.msra.mxu0 0.0
    %438 = vmatprep.subr.mxu0 0.0
    %439 = vmatpush1.msra.mxu0 0.0
    %440 = vmatprep.subr.mxu0 0.0
    %441 = vmatpush1.msra.mxu0 0.0
    %442 = vmatprep.subr.mxu0 0.0
    %443 = vmatpush1.msra.mxu0 0.0
    %444 = vmatprep.subr.mxu0 0.0
    %445 = vmatpush1.msra.mxu0 0.0
    %446 = vmatprep.subr.mxu0 0.0
    %447 = vmatpush1.msra.mxu0 0.0
    %448 = vmatprep.subr.mxu0 0.0
    %449 = vmatpush1.msra.mxu0 0.0
    %450 = vmatprep.subr.mxu0 0.0
    %451 = vmatpush1.msra.mxu0 0.0
    %452 = vmatprep.subr.mxu0 0.0
    %453 = vmatpush1.msra.mxu0 0.0
    %454 = vmatprep.subr.mxu0 0.0
    %455 = vmatpush1.msra.mxu0 0.0
    %456 = vmatprep.subr.mxu0 0.0
    %457 = vmatpush1.msra.mxu0 0.0
    %458 = vmatprep.subr.mxu0 0.0
    %459 = vmatpush1.msra.mxu0 0.0
    %460 = vmatprep.subr.mxu0 0.0
    %461 = vmatpush1.msra.mxu0 0.0
    %462 = vmatprep.subr.mxu0 0.0
    %463 = vmatpush1.msra.mxu0 0.0
    %464 = vmatprep.subr.mxu0 0.0
    %465 = vmatpush1.msra.mxu0 0.0
    %466 = vmatprep.subr.mxu0 0.0
    %467 = vmatpush1.msra.mxu0 0.0
    %468 = vmatprep.subr.mxu0 0.0
    %469 = vmatpush1.msra.mxu0 0.0
    %470 = vmatprep.subr.mxu0 0.0
    %471 = vmatpush1.msra.mxu0 0.0
    %472 = vmatprep.subr.mxu0 0.0
    %473 = vmatpush1.msra.mxu0 0.0
    %474 = vmatprep.subr.mxu0 0.0
    %475 = vmatpush1.msra.mxu0 0.0
    %476 = vmatprep.subr.mxu0 0.0
    %477 = vmatpush1.msra.mxu0 0.0
    %478 = vmatprep.subr.mxu0 0.0
    %479 = vmatpush1.msra.mxu0 0.0
    %480 = vmatprep.subr.mxu0 0.0
    %481 = vmatpush1.msra.mxu0 0.0
    %482 = vmatprep.subr.mxu0 0.0
    %483 = vmatpush1.msra.mxu0 0.0
    %484 = vmatprep.subr.mxu0 0.0
    %485 = vmatpush1.msra.mxu0 0.0
    %486 = vmatprep.subr.mxu0 0.0
    %487 = vmatpush1.msra.mxu0 0.0
    %488 = vmatprep.subr.mxu0 0.0
    %489 = vmatpush1.msra.mxu0 0.0
    %490 = vmatprep.mubr.f32.mxu0 0.0
    %491 = vmatmul.mubr.f32.gmra.mrb[0].mxu0 %v271
    %v492 = vpop.f32.mrb[0].mxu0
    %v493 = vadd.f32 0.0, %v492
    %v494 = vpop.f32.mrb[0].mxu0
    %495 = vmatprep.mubr.f32.mxu0 0.0
    %496 = vmatmul.mubr.f32.gmra.mrb[0].mxu0 %v274
    %v497 = vpop.f32.mrb[0].mxu0
    %v498 = vadd.f32 0.0, %v497
    %v499 = vpop.f32.mrb[0].mxu0
    %500 = vdwg.mxu0
    %501 = vmatprep.subr.mxu0 0.0
    %502 = vmatpush1.msra.mxu0 %v220
    %503 = vmatprep.subr.mxu0 0.0
    %504 = vmatpush1.msra.mxu0 %v225
    %505 = vmatprep.subr.mxu0 0.0
    %506 = vmatpush1.msra.mxu0 0.0
    %507 = vmatprep.subr.mxu0 0.0
    %508 = vmatpush1.msra.mxu0 0.0
    %509 = vmatprep.subr.mxu0 0.0
    %510 = vmatpush1.msra.mxu0 0.0
    %511 = vmatprep.subr.mxu0 0.0
    %512 = vmatpush1.msra.mxu0 0.0
    %513 = vmatprep.subr.mxu0 0.0
    %514 = vmatpush1.msra.mxu0 0.0
    %515 = vmatprep.subr.mxu0 0.0
    %516 = vmatpush1.msra.mxu0 0.0
    %517 = vmatprep.subr.mxu0 0.0
    %518 = vmatpush1.msra.mxu0 0.0
    %519 = vmatprep.subr.mxu0 0.0
    %520 = vmatpush1.msra.mxu0 0.0
    %521 = vmatprep.subr.mxu0 0.0
    %522 = vmatpush1.msra.mxu0 0.0
    %523 = vmatprep.subr.mxu0 0.0
    %524 = vmatpush1.msra.mxu0 0.0
    %525 = vmatprep.subr.mxu0 0.0
    %526 = vmatpush1.msra.mxu0 0.0
    %527 = vmatprep.subr.mxu0 0.0
    %528 = vmatpush1.msra.mxu0 0.0
    %529 = vmatprep.subr.mxu0 0.0
    %530 = vmatpush1.msra.mxu0 0.0
    %531 = vmatprep.subr.mxu0 0.0
    %532 = vmatpush1.msra.mxu0 0.0
    %533 = vmatprep.subr.mxu0 0.0
    %534 = vmatpush1.msra.mxu0 0.0
    %535 = vmatprep.subr.mxu0 0.0
    %536 = vmatpush1.msra.mxu0 0.0
    %537 = vmatprep.subr.mxu0 0.0
    %538 = vmatpush1.msra.mxu0 0.0
    %539 = vmatprep.subr.mxu0 0.0
    %540 = vmatpush1.msra.mxu0 0.0
    %541 = vmatprep.subr.mxu0 0.0
    %542 = vmatpush1.msra.mxu0 0.0
    %543 = vmatprep.subr.mxu0 0.0
    %544 = vmatpush1.msra.mxu0 0.0
    %545 = vmatprep.subr.mxu0 0.0
    %546 = vmatpush1.msra.mxu0 0.0
    %547 = vmatprep.subr.mxu0 0.0
    %548 = vmatpush1.msra.mxu0 0.0
    %549 = vmatprep.subr.mxu0 0.0
    %550 = vmatpush1.msra.mxu0 0.0
    %551 = vmatprep.subr.mxu0 0.0
    %552 = vmatpush1.msra.mxu0 0.0
    %553 = vmatprep.subr.mxu0 0.0
    %554 = vmatpush1.msra.mxu0 0.0
    %555 = vmatprep.subr.mxu0 0.0
    %556 = vmatpush1.msra.mxu0 0.0
    %557 = vmatprep.subr.mxu0 0.0
    %558 = vmatpush1.msra.mxu0 0.0
    %559 = vmatprep.subr.mxu0 0.0
    %560 = vmatpush1.msra.mxu0 0.0
    %561 = vmatprep.subr.mxu0 0.0
    %562 = vmatpush1.msra.mxu0 0.0
    %563 = vmatprep.subr.mxu0 0.0
    %564 = vmatpush1.msra.mxu0 0.0
    %565 = vmatprep.mubr.f32.mxu0 0.0
    %566 = vmatmul.mubr.f32.gmra.mrb[0].mxu0 %v271
    %v567 = vpop.f32.mrb[0].mxu0
    %v568 = vadd.f32 0.0, %v567
    %v569 = vpop.f32.mrb[0].mxu0
    %570 = vmatprep.mubr.f32.mxu0 0.0
    %571 = vmatmul.mubr.f32.gmra.mrb[0].mxu0 %v274
    %v572 = vpop.f32.mrb[0].mxu0
    %v573 = vadd.f32 0.0, %v572
    %v574 = vpop.f32.mrb[0].mxu0
    %575 = vdwg.mxu0
    %576 = vmatprep.subr.mxu0 0.0
    %577 = vmatpush1.msra.mxu0 %v230
    %578 = vmatprep.subr.mxu0 0.0
    %579 = vmatpush1.msra.mxu0 %v235
    %580 = vmatprep.subr.mxu0 0.0
    %581 = vmatpush1.msra.mxu0 0.0
    %582 = vmatprep.subr.mxu0 0.0
    %583 = vmatpush1.msra.mxu0 0.0
    %584 = vmatprep.subr.mxu0 0.0
    %585 = vmatpush1.msra.mxu0 0.0
    %586 = vmatprep.subr.mxu0 0.0
    %587 = vmatpush1.msra.mxu0 0.0
    %588 = vmatprep.subr.mxu0 0.0
    %589 = vmatpush1.msra.mxu0 0.0
    %590 = vmatprep.subr.mxu0 0.0
    %591 = vmatpush1.msra.mxu0 0.0
    %592 = vmatprep.subr.mxu0 0.0
    %593 = vmatpush1.msra.mxu0 0.0
    %594 = vmatprep.subr.mxu0 0.0
    %595 = vmatpush1.msra.mxu0 0.0
    %596 = vmatprep.subr.mxu0 0.0
    %597 = vmatpush1.msra.mxu0 0.0
    %598 = vmatprep.subr.mxu0 0.0
    %599 = vmatpush1.msra.mxu0 0.0
    %600 = vmatprep.subr.mxu0 0.0
    %601 = vmatpush1.msra.mxu0 0.0
    %602 = vmatprep.subr.mxu0 0.0
    %603 = vmatpush1.msra.mxu0 0.0
    %604 = vmatprep.subr.mxu0 0.0
    %605 = vmatpush1.msra.mxu0 0.0
    %606 = vmatprep.subr.mxu0 0.0
    %607 = vmatpush1.msra.mxu0 0.0
    %608 = vmatprep.subr.mxu0 0.0
    %609 = vmatpush1.msra.mxu0 0.0
    %610 = vmatprep.subr.mxu0 0.0
    %611 = vmatpush1.msra.mxu0 0.0
    %612 = vmatprep.subr.mxu0 0.0
    %613 = vmatpush1.msra.mxu0 0.0
    %614 = vmatprep.subr.mxu0 0.0
    %615 = vmatpush1.msra.mxu0 0.0
    %616 = vmatprep.subr.mxu0 0.0
    %617 = vmatpush1.msra.mxu0 0.0
    %618 = vmatprep.subr.mxu0 0.0
    %619 = vmatpush1.msra.mxu0 0.0
    %620 = vmatprep.subr.mxu0 0.0
    %621 = vmatpush1.msra.mxu0 0.0
    %622 = vmatprep.subr.mxu0 0.0
    %623 = vmatpush1.msra.mxu0 0.0
    %624 = vmatprep.subr.mxu0 0.0
    %625 = vmatpush1.msra.mxu0 0.0
    %626 = vmatprep.subr.mxu0 0.0
    %627 = vmatpush1.msra.mxu0 0.0
    %628 = vmatprep.subr.mxu0 0.0
    %629 = vmatpush1.msra.mxu0 0.0
    %630 = vmatprep.subr.mxu0 0.0
    %631 = vmatpush1.msra.mxu0 0.0
    %632 = vmatprep.subr.mxu0 0.0
    %633 = vmatpush1.msra.mxu0 0.0
    %634 = vmatprep.subr.mxu0 0.0
    %635 = vmatpush1.msra.mxu0 0.0
    %636 = vmatprep.subr.mxu0 0.0
    %637 = vmatpush1.msra.mxu0 0.0
    %638 = vmatprep.subr.mxu0 0.0
    %639 = vmatpush1.msra.mxu0 0.0
    %640 = vmatprep.mubr.f32.mxu0 0.0
    %641 = vmatmul.mubr.f32.gmra.mrb[0].mxu0 %v271
    %v642 = vpop.f32.mrb[0].mxu0
    %v643 = vadd.f32 0.0, %v642
    %v644 = vpop.f32.mrb[0].mxu0
    %645 = vmatprep.mubr.f32.mxu0 0.0
    %646 = vmatmul.mubr.f32.gmra.mrb[0].mxu0 %v274
    %v647 = vpop.f32.mrb[0].mxu0
    %v648 = vadd.f32 0.0, %v647
    %v649 = vpop.f32.mrb[0].mxu0
    %650 = vdwg.mxu0
    %651 = vmatprep.subr.mxu0 0.0
    %652 = vmatpush1.msra.mxu0 %v240
    %653 = vmatprep.subr.mxu0 0.0
    %654 = vmatpush1.msra.mxu0 %v245
    %655 = vmatprep.subr.mxu0 0.0
    %656 = vmatpush1.msra.mxu0 0.0
    %657 = vmatprep.subr.mxu0 0.0
    %658 = vmatpush1.msra.mxu0 0.0
    %659 = vmatprep.subr.mxu0 0.0
    %660 = vmatpush1.msra.mxu0 0.0
    %661 = vmatprep.subr.mxu0 0.0
    %662 = vmatpush1.msra.mxu0 0.0
    %663 = vmatprep.subr.mxu0 0.0
    %664 = vmatpush1.msra.mxu0 0.0
    %665 = vmatprep.subr.mxu0 0.0
    %666 = vmatpush1.msra.mxu0 0.0
    %667 = vmatprep.subr.mxu0 0.0
    %668 = vmatpush1.msra.mxu0 0.0
    %669 = vmatprep.subr.mxu0 0.0
    %670 = vmatpush1.msra.mxu0 0.0
    %671 = vmatprep.subr.mxu0 0.0
    %672 = vmatpush1.msra.mxu0 0.0
    %673 = vmatprep.subr.mxu0 0.0
    %674 = vmatpush1.msra.mxu0 0.0
    %675 = vmatprep.subr.mxu0 0.0
    %676 = vmatpush1.msra.mxu0 0.0
    %677 = vmatprep.subr.mxu0 0.0
    %678 = vmatpush1.msra.mxu0 0.0
    %679 = vmatprep.subr.mxu0 0.0
    %680 = vmatpush1.msra.mxu0 0.0
    %681 = vmatprep.subr.mxu0 0.0
    %682 = vmatpush1.msra.mxu0 0.0
    %683 = vmatprep.subr.mxu0 0.0
    %684 = vmatpush1.msra.mxu0 0.0
    %685 = vmatprep.subr.mxu0 0.0
    %686 = vmatpush1.msra.mxu0 0.0
    %687 = vmatprep.subr.mxu0 0.0
    %688 = vmatpush1.msra.mxu0 0.0
    %689 = vmatprep.subr.mxu0 0.0
    %690 = vmatpush1.msra.mxu0 0.0
    %691 = vmatprep.subr.mxu0 0.0
    %692 = vmatpush1.msra.mxu0 0.0
    %693 = vmatprep.subr.mxu0 0.0
    %694 = vmatpush1.msra.mxu0 0.0
    %695 = vmatprep.subr.mxu0 0.0
    %696 = vmatpush1.msra.mxu0 0.0
    %697 = vmatprep.subr.mxu0 0.0
    %698 = vmatpush1.msra.mxu0 0.0
    %699 = vmatprep.subr.mxu0 0.0
    %700 = vmatpush1.msra.mxu0 0.0
    %701 = vmatprep.subr.mxu0 0.0
    %702 = vmatpush1.msra.mxu0 0.0
    %703 = vmatprep.subr.mxu0 0.0
    %704 = vmatpush1.msra.mxu0 0.0
    %705 = vmatprep.subr.mxu0 0.0
    %706 = vmatpush1.msra.mxu0 0.0
    %707 = vmatprep.subr.mxu0 0.0
    %708 = vmatpush1.msra.mxu0 0.0
    %709 = vmatprep.subr.mxu0 0.0
    %710 = vmatpush1.msra.mxu0 0.0
    %711 = vmatprep.subr.mxu0 0.0
    %712 = vmatpush1.msra.mxu0 0.0
    %713 = vmatprep.subr.mxu0 0.0
    %714 = vmatpush1.msra.mxu0 0.0
    %715 = vmatprep.mubr.f32.mxu0 0.0
    %716 = vmatmul.mubr.f32.gmra.mrb[0].mxu0 %v271
    %v717 = vpop.f32.mrb[0].mxu0
    %v718 = vadd.f32 0.0, %v717
    %v719 = vpop.f32.mrb[0].mxu0
    %720 = vmatprep.mubr.f32.mxu0 0.0
    %721 = vmatmul.mubr.f32.gmra.mrb[0].mxu0 %v274
    %v722 = vpop.f32.mrb[0].mxu0
    %v723 = vadd.f32 0.0, %v722
    %v724 = vpop.f32.mrb[0].mxu0
    %725 = vdwg.mxu0
    %726 = vmatprep.subr.mxu0 0.0
    %727 = vmatpush1.msra.mxu0 %v250
    %728 = vmatprep.subr.mxu0 0.0
    %729 = vmatpush1.msra.mxu0 %v255
    %730 = vmatprep.subr.mxu0 0.0
    %731 = vmatpush1.msra.mxu0 0.0
    %732 = vmatprep.subr.mxu0 0.0
    %733 = vmatpush1.msra.mxu0 0.0
    %734 = vmatprep.subr.mxu0 0.0
    %735 = vmatpush1.msra.mxu0 0.0
    %736 = vmatprep.subr.mxu0 0.0
    %737 = vmatpush1.msra.mxu0 0.0
    %738 = vmatprep.subr.mxu0 0.0
    %739 = vmatpush1.msra.mxu0 0.0
    %740 = vmatprep.subr.mxu0 0.0
    %741 = vmatpush1.msra.mxu0 0.0
    %742 = vmatprep.subr.mxu0 0.0
    %743 = vmatpush1.msra.mxu0 0.0
    %744 = vmatprep.subr.mxu0 0.0
    %745 = vmatpush1.msra.mxu0 0.0
    %746 = vmatprep.subr.mxu0 0.0
    %747 = vmatpush1.msra.mxu0 0.0
    %748 = vmatprep.subr.mxu0 0.0
    %749 = vmatpush1.msra.mxu0 0.0
    %750 = vmatprep.subr.mxu0 0.0
    %751 = vmatpush1.msra.mxu0 0.0
    %752 = vmatprep.subr.mxu0 0.0
    %753 = vmatpush1.msra.mxu0 0.0
    %754 = vmatprep.subr.mxu0 0.0
    %755 = vmatpush1.msra.mxu0 0.0
    %756 = vmatprep.subr.mxu0 0.0
    %757 = vmatpush1.msra.mxu0 0.0
    %758 = vmatprep.subr.mxu0 0.0
    %759 = vmatpush1.msra.mxu0 0.0
    %760 = vmatprep.subr.mxu0 0.0
    %761 = vmatpush1.msra.mxu0 0.0
    %762 = vmatprep.subr.mxu0 0.0
    %763 = vmatpush1.msra.mxu0 0.0
    %764 = vmatprep.subr.mxu0 0.0
    %765 = vmatpush1.msra.mxu0 0.0
    %766 = vmatprep.subr.mxu0 0.0
    %767 = vmatpush1.msra.mxu0 0.0
    %768 = vmatprep.subr.mxu0 0.0
    %769 = vmatpush1.msra.mxu0 0.0
    %770 = vmatprep.subr.mxu0 0.0
    %771 = vmatpush1.msra.mxu0 0.0
    %772 = vmatprep.subr.mxu0 0.0
    %773 = vmatpush1.msra.mxu0 0.0
    %774 = vmatprep.subr.mxu0 0.0
    %775 = vmatpush1.msra.mxu0 0.0
    %776 = vmatprep.subr.mxu0 0.0
    %777 = vmatpush1.msra.mxu0 0.0
    %778 = vmatprep.subr.mxu0 0.0
    %779 = vmatpush1.msra.mxu0 0.0
    %780 = vmatprep.subr.mxu0 0.0
    %781 = vmatpush1.msra.mxu0 0.0
    %782 = vmatprep.subr.mxu0 0.0
    %783 = vmatpush1.msra.mxu0 0.0
    %784 = vmatprep.subr.mxu0 0.0
    %785 = vmatpush1.msra.mxu0 0.0
    %786 = vmatprep.subr.mxu0 0.0
    %787 = vmatpush1.msra.mxu0 0.0
    %788 = vmatprep.subr.mxu0 0.0
    %789 = vmatpush1.msra.mxu0 0.0
    %790 = vmatprep.mubr.f32.mxu0 0.0
    %791 = vmatmul.mubr.f32.gmra.mrb[0].mxu0 %v271
    %v792 = vpop.f32.mrb[0].mxu0
    %v793 = vadd.f32 0.0, %v792
    %v794 = vpop.f32.mrb[0].mxu0
    %795 = vmatprep.mubr.f32.mxu0 0.0
    %796 = vmatmul.mubr.f32.gmra.mrb[0].mxu0 %v274
    %v797 = vpop.f32.mrb[0].mxu0
    %v798 = vadd.f32 0.0, %v797
    %v799 = vpop.f32.mrb[0].mxu0
    %800 = vdwg.mxu0
    %801 = vmatprep.subr.mxu0 0.0
    %802 = vmatpush1.msra.mxu0 %v260
    %803 = vmatprep.subr.mxu0 0.0
    %804 = vmatpush1.msra.mxu0 %v265
    %805 = vmatprep.subr.mxu0 0.0
    %806 = vmatpush1.msra.mxu0 0.0
    %807 = vmatprep.subr.mxu0 0.0
    %808 = vmatpush1.msra.mxu0 0.0
    %809 = vmatprep.subr.mxu0 0.0
    %810 = vmatpush1.msra.mxu0 0.0
    %811 = vmatprep.subr.mxu0 0.0
    %812 = vmatpush1.msra.mxu0 0.0
    %813 = vmatprep.subr.mxu0 0.0
    %814 = vmatpush1.msra.mxu0 0.0
    %815 = vmatprep.subr.mxu0 0.0
    %816 = vmatpush1.msra.mxu0 0.0
    %817 = vmatprep.subr.mxu0 0.0
    %818 = vmatpush1.msra.mxu0 0.0
    %819 = vmatprep.subr.mxu0 0.0
    %820 = vmatpush1.msra.mxu0 0.0
    %821 = vmatprep.subr.mxu0 0.0
    %822 = vmatpush1.msra.mxu0 0.0
    %823 = vmatprep.subr.mxu0 0.0
    %824 = vmatpush1.msra.mxu0 0.0
    %825 = vmatprep.subr.mxu0 0.0
    %826 = vmatpush1.msra.mxu0 0.0
    %827 = vmatprep.subr.mxu0 0.0
    %828 = vmatpush1.msra.mxu0 0.0
    %829 = vmatprep.subr.mxu0 0.0
    %830 = vmatpush1.msra.mxu0 0.0
    %831 = vmatprep.subr.mxu0 0.0
    %832 = vmatpush1.msra.mxu0 0.0
    %833 = vmatprep.subr.mxu0 0.0
    %834 = vmatpush1.msra.mxu0 0.0
    %835 = vmatprep.subr.mxu0 0.0
    %836 = vmatpush1.msra.mxu0 0.0
    %837 = vmatprep.subr.mxu0 0.0
    %838 = vmatpush1.msra.mxu0 0.0
    %839 = vmatprep.subr.mxu0 0.0
    %840 = vmatpush1.msra.mxu0 0.0
    %841 = vmatprep.subr.mxu0 0.0
    %842 = vmatpush1.msra.mxu0 0.0
    %843 = vmatprep.subr.mxu0 0.0
    %844 = vmatpush1.msra.mxu0 0.0
    %845 = vmatprep.subr.mxu0 0.0
    %846 = vmatpush1.msra.mxu0 0.0
    %847 = vmatprep.subr.mxu0 0.0
    %848 = vmatpush1.msra.mxu0 0.0
    %849 = vmatprep.subr.mxu0 0.0
    %850 = vmatpush1.msra.mxu0 0.0
    %851 = vmatprep.subr.mxu0 0.0
    %852 = vmatpush1.msra.mxu0 0.0
    %853 = vmatprep.subr.mxu0 0.0
    %854 = vmatpush1.msra.mxu0 0.0
    %855 = vmatprep.subr.mxu0 0.0
    %856 = vmatpush1.msra.mxu0 0.0
    %857 = vmatprep.subr.mxu0 0.0
    %858 = vmatpush1.msra.mxu0 0.0
    %859 = vmatprep.subr.mxu0 0.0
    %860 = vmatpush1.msra.mxu0 0.0
    %861 = vmatprep.subr.mxu0 0.0
    %862 = vmatpush1.msra.mxu0 0.0
    %863 = vmatprep.subr.mxu0 0.0
    %864 = vmatpush1.msra.mxu0 0.0
    %865 = vmatprep.mubr.f32.mxu0 0.0
    %866 = vmatmul.mubr.f32.gmra.mrb[0].mxu0 %v271
    %v867 = vpop.f32.mrb[0].mxu0
    %v868 = vadd.f32 0.0, %v867
    %v869 = vpop.f32.mrb[0].mxu0
    %870 = vmatprep.mubr.f32.mxu0 0.0
    %871 = vmatmul.mubr.f32.gmra.mrb[0].mxu0 %v274
    %v872 = vpop.f32.mrb[0].mxu0
    %v873 = vadd.f32 0.0, %v872
    %v874 = vpop.f32.mrb[0].mxu0
    %875 = vdwg.mxu0
    %876 = vst.msk [vmem:[#allocation8] sm:$0xff] %vm74, %v343
    %877 = vst.msk [vmem:[#allocation8 + $0x8] sm:$0xff] %vm74, %v348
    %878 = vst.msk [vmem:[#allocation8 + $0x10] sm:$0xff] %vm74, %v418
    %879 = vst.msk [vmem:[#allocation8 + $0x18] sm:$0xff] %vm74, %v423
    %880 = vst.msk [vmem:[#allocation8 + $0x20] sm:$0xff] %vm74, %v493
    %881 = vst.msk [vmem:[#allocation8 + $0x28] sm:$0xff] %vm74, %v498
    %882 = vst.msk [vmem:[#allocation8 + $0x30] sm:$0xff] %vm74, %v568
    %883 = vst.msk [vmem:[#allocation8 + $0x38] sm:$0xff] %vm74, %v573
    %884 = vst.msk [vmem:[#allocation8 + $0x40] sm:$0xff] %vm74, %v643
    %885 = vst.msk [vmem:[#allocation8 + $0x48] sm:$0xff] %vm74, %v648
    %886 = vst.msk [vmem:[#allocation8 + $0x50] sm:$0xff] %vm74, %v718
    %887 = vst.msk [vmem:[#allocation8 + $0x58] sm:$0xff] %vm74, %v723
    %888 = vst.msk [vmem:[#allocation8 + $0x60] sm:$0xff] %vm74, %v793
    %889 = vst.msk [vmem:[#allocation8 + $0x68] sm:$0xff] %vm74, %v798
    %890 = vst.msk [vmem:[#allocation8 + $0x70] sm:$0xff] %vm74, %v868
    %891 = vst.msk [vmem:[#allocation8 + $0x78] sm:$0xff] %vm74, %v873
    // Predicated region
    $region26: #{tpu_custom_call.1} parent=1 // pred_check
      _
    $region27: #{tpu_custom_call.1} parent=1 // pred_check_branch
      %893 = sbr.rel (0) target = $region29
    $region28: #{tpu_custom_call.1} parent=1 // pred_region
      %s895 = ssub.s32 2048, 2048
      %896 = vsyncadd [#allocation4], %s895
      %s897 = sshll.u32 [#allocation8], 4
      %s898 = int_to_ptr.vmem [resolvable:$true] %s897
      %903 = dma.vmem_to_hbm [thread:$0]  %s898, 2048, %s3, [#allocation4], 128, 128, 8
    $region29: #{tpu_custom_call.1} parent=1 // pred_fallthru
      _
    // Predicated region
    $region30: #{tpu_custom_call.1} parent=1 // pred_check
      _
    $region31: #{tpu_custom_call.1} parent=1 // pred_check_branch
      %905 = sbr.rel (0) target = $region33
    $region32: #{tpu_custom_call.1} parent=1 // pred_region
      %906 = dma.done [#allocation4], 2048
    $region33: #{tpu_custom_call.1} parent=1 // pred_fallthru
      _
    %907 = vsyncpa [#allocation3], 1
    %908 = vsyncpa [#allocation6], 1
    %909 = vsyncpa [#allocation4], 1

</llo_original>
